<compile_context>
chip_gen: v6e
topology: v6e:2x2x1
jax: 0.10.0
libtpu: 0.0.40
codegen_flags: <defaults>
</compile_context>

<pallas_src>
import functools
import math

import jax
import jax.numpy as jnp
from jax.experimental import pallas as pl
from jax.experimental.pallas import tpu as pltpu


# ----------------------------------------------------------------------------
# Kernels
# ----------------------------------------------------------------------------
def _length_loss_kernel(x_ref, o_ref, *, scale: float, post_scale: float):
    """Elementwise tile: o = (diff(x, axis=0) * sqrt(w))**2 [* post_scale]."""
    x = x_ref[...].astype(jnp.float32)      # one load per tile; f32 compute
    d = x[1:, :] - x[:-1, :]                # halo-free: T is never tiled
    if scale != 1.0:                        # sqrt(weight) folded into the diff
        d = d * jnp.float32(scale)
    sq = d * d
    if post_scale != 1.0:                   # only used for negative weights
        sq = sq * jnp.float32(post_scale)
    o_ref[...] = sq.astype(o_ref.dtype)


def _length_loss_sum_kernel(x_ref, o_ref, *, scale: float, post_scale: float):
    """Fused reduction: accumulate sum(loss) over all tiles into a (1,1) f32."""
    @pl.when(pl.program_id(0) == 0)
    def _init():
        o_ref[...] = jnp.zeros_like(o_ref)

    x = x_ref[...].astype(jnp.float32)
    d = x[1:, :] - x[:-1, :]
    if scale != 1.0:
        d = d * jnp.float32(scale)
    sq = d * d
    if post_scale != 1.0:
        sq = sq * jnp.float32(post_scale)
    # f32 accumulator across grid steps (padded columns are zeros -> contribute 0).
    o_ref[...] += jnp.sum(sq)


# ----------------------------------------------------------------------------
# Tiling / wrapper helpers
# ----------------------------------------------------------------------------
def _vmem_capacity_bytes() -> int:
    """Physical VMEM of the local chip; falls back to v7x's 64 MiB per TC."""
    default = 64 << 20
    try:
        info = pltpu.get_tpu_info()
    except Exception:
        return default
    for name in ("vmem_capacity_bytes", "vmem_bytes", "vmem_capacity"):
        val = getattr(info, name, None)
        if isinstance(val, int) and val > 0:
            return int(val)
    return default


def _round_up(x: int, n: int) -> int:
    return ((x + n - 1) // n) * n


def _tiling(t: int, m: int, itemsize: int):
    """Choose a lane-dense block width along M and a scoped-VMEM limit.

    * per-input-tile budget = VMEM/16 (8 MiB on 128-MiB chips, 4 MiB on v7x),
      dtype-aware.  With the ~same-sized output tile and double buffering this
      stays <= VMEM/4, well under the explicit vmem_limit (3/4 of physical).
    * prefer >= 2 (ideally 4) grid steps so DMA/compute overlap and v7x's two
      TensorCores both get work, as long as each block stays >= 128 lanes.
    """
    vmem_cap = _vmem_capacity_bytes()
    budget = max(128 * 1024, vmem_cap // 16)
    m128 = _round_up(m, 128)

    cols = max(128, (budget // (t * itemsize)) // 128 * 128)
    block_n = min(cols, m128)

    target_steps = min(4, m128 // 128)
    if target_steps >= 2:
        block_n = min(block_n, max(128, (m128 // target_steps) // 128 * 128))

    vmem_limit = int(vmem_cap * 3 // 4)
    return int(block_n), vmem_limit


def _weight_scales(weight: float):
    w = float(weight)
    if w >= 0.0:
        return math.sqrt(w), 1.0
    return 1.0, w


# ----------------------------------------------------------------------------
# Public wrappers
# ----------------------------------------------------------------------------
def length_loss(unit_length: jax.Array, weight: float = 1.0) -> jax.Array:
    """Pallas LengthLoss.forward: diff(unit_length, n=1, axis=0)**2 * weight."""
    t, m = unit_length.shape
    if t < 2:
        raise ValueError("LengthLoss requires T >= 2 along axis 0.")
    scale, post_scale = _weight_scales(weight)

    itemsize = jnp.dtype(unit_length.dtype).itemsize
    block_n, vmem_limit = _tiling(t, m, itemsize)
    m_pad = _round_up(m, block_n)

    x = unit_length
    if m_pad != m:
        # Lane-dense padding keeps stores as unmasked vst and keeps the grid
        # pipelined even for ragged worm-segment counts; sliced off below.
        x = jnp.pad(x, ((0, 0), (0, m_pad - m)))
    grid = (m_pad // block_n,)

    kernel = functools.partial(
        _length_loss_kernel, scale=scale, post_scale=post_scale
    )
    in_bytes = t * m_pad * itemsize
    out_bytes = (t - 1) * m_pad * itemsize

    out = pl.pallas_call(
        kernel,
        out_shape=jax.ShapeDtypeStruct((t - 1, m_pad), unit_length.dtype),
        grid=grid,
        in_specs=[pl.BlockSpec((t, block_n), lambda j: (0, j))],
        out_specs=pl.BlockSpec((t - 1, block_n), lambda j: (0, j)),
        compiler_params=pltpu.CompilerParams(
            dimension_semantics=("parallel",),
            vmem_limit_bytes=vmem_limit,
        ),
        cost_estimate=pl.CostEstimate(
            flops=3 * (t - 1) * m_pad,
            transcendentals=0,
            bytes_accessed=in_bytes + out_bytes,
        ),
    )(x)

    if m_pad != m:
        out = out[:, :m]
    return out
    # TODO(synk): for very small M on v7x, additionally tile T (1-row carry in a
    # VMEM scratch across an "arbitrary" T axis) so both TensorCores get work.


def length_loss_sum(unit_length: jax.Array, weight: float = 1.0) -> jax.Array:
    """Fused variant: sum(diff(unit_length, axis=0)**2 * weight) as an f32 scalar.

    Use when the loss is summed/meaned downstream: it drops the (T-1, M) HBM
    write-back (~half of all HBM traffic in the mem-bound elementwise kernel).
    """
    t, m = unit_length.shape
    if t < 2:
        raise ValueError("LengthLoss requires T >= 2 along axis 0.")
    scale, post_scale = _weight_scales(weight)

    itemsize = jnp.dtype(unit_length.dtype).itemsize
    block_n, vmem_limit = _tiling(t, m, itemsize)
    m_pad = _round_up(m, block_n)

    x = unit_length
    if m_pad != m:
        x = jnp.pad(x, ((0, 0), (0, m_pad - m)))  # zero pad -> zero contribution
    grid = (m_pad // block_n,)

    kernel = functools.partial(
        _length_loss_sum_kernel, scale=scale, post_scale=post_scale
    )

    out = pl.pallas_call(
        kernel,
        out_shape=jax.ShapeDtypeStruct((1, 1), jnp.float32),
        grid=grid,
        in_specs=[pl.BlockSpec((t, block_n), lambda j: (0, j))],
        out_specs=pl.BlockSpec((1, 1), lambda j: (0, 0)),  # resident accumulator
        compiler_params=pltpu.CompilerParams(
            dimension_semantics=("arbitrary",),
            vmem_limit_bytes=vmem_limit,
        ),
        cost_estimate=pl.CostEstimate(
            flops=4 * (t - 1) * m_pad,
            transcendentals=0,
            bytes_accessed=t * m_pad * itemsize + 4,
        ),
    )(x)
    return out[0, 0]


# ----------------------------------------------------------------------------
# Self-test
# ----------------------------------------------------------------------------
if __name__ == "__main__":
    key = jax.random.PRNGKey(0)
    k1, k2 = jax.random.split(key)

    # Case 1: lane-dense M (multiple of 128).
    T1, M1 = 16, 256
    x1 = jax.random.uniform(k1, (T1, M1), dtype=jnp.float32)
    w1 = 0.5
    out1 = jax.block_until_ready(length_loss(x1, weight=w1))
    ref1 = jnp.square(jnp.diff(x1, n=1, axis=0)) * w1
    assert out1.shape == ref1.shape, (out1.shape, ref1.shape)
    assert jnp.allclose(out1, ref1, atol=1e-6, rtol=1e-6), "elementwise mismatch (case 1)"

    # Case 2: ragged M (exercises wrapper-side padding) + negative-weight path.
    T2, M2 = 10, 100
    x2 = jax.random.uniform(k2, (T2, M2), dtype=jnp.float32)
    w2 = -1.5
    out2 = jax.block_until_ready(length_loss(x2, weight=w2))
    ref2 = jnp.square(jnp.diff(x2, n=1, axis=0)) * w2
    assert out2.shape == ref2.shape, (out2.shape, ref2.shape)
    assert jnp.allclose(out2, ref2, atol=1e-6, rtol=1e-6), "elementwise mismatch (case 2)"

    # Fused-reduction variant (for callers that sum/mean the loss downstream).
    s1 = jax.block_until_ready(length_loss_sum(x1, weight=w1))
    assert jnp.allclose(s1, jnp.sum(ref1), atol=1e-3, rtol=1e-5), "sum mismatch (case 1)"
    s2 = jax.block_until_ready(length_loss_sum(x2, weight=w2))
    assert jnp.allclose(s2, jnp.sum(ref2), atol=1e-3, rtol=1e-5), "sum mismatch (case 2)"

    print("KERNEL_OK")
</pallas_src>

<mosaic_0001>
module attributes {stable_mosaic.version = 11 : i64} {
  func.func @_length_loss_kernel(%arg0: i32, %arg1: memref<16x128xf32, #tpu.memory_space<vmem>>, %arg2: memref<15x128xf32, #tpu.memory_space<vmem>>) attributes {dimension_semantics = [#tpu.dimension_semantics<parallel>], iteration_bounds = array<i64: 2>, scalar_prefetch = 0 : i64, scratch_operands = 0 : i64, tpu.core_type = #tpu.core_type<tc>, window_params = [{transform_indices = @transform_0, window_bounds = array<i64: 16, 128>}, {transform_indices = @transform_1, window_bounds = array<i64: 15, 128>}]} {
    %c0 = arith.constant 0 : index
    %c0_0 = arith.constant 0 : index
    %0 = vector.load %arg1[%c0, %c0_0] : memref<16x128xf32, #tpu.memory_space<vmem>>, vector<16x128xf32>
    %1 = vector.extract_strided_slice %0 {offsets = [1, 0], sizes = [15, 128], strides = [1, 1]} : vector<16x128xf32> to vector<15x128xf32>
    %2 = vector.extract_strided_slice %0 {offsets = [0, 0], sizes = [15, 128], strides = [1, 1]} : vector<16x128xf32> to vector<15x128xf32>
    %3 = arith.subf %1, %2 : vector<15x128xf32>
    %cst = arith.constant 0.707106769 : f32
    %4 = vector.broadcast %cst : f32 to vector<15x128xf32>
    %5 = arith.mulf %3, %4 : vector<15x128xf32>
    %6 = arith.mulf %5, %5 : vector<15x128xf32>
    %c0_1 = arith.constant 0 : index
    %c0_2 = arith.constant 0 : index
    %7 = vector.load %arg2[%c0_1, %c0_2] : memref<15x128xf32, #tpu.memory_space<vmem>>, vector<15x128xf32>
    tpu.vector_store %arg2[%c0_1, %c0_2], %6 {strides = array<i32>} : memref<15x128xf32, #tpu.memory_space<vmem>>, vector<15x128xf32>,
    return
  }
  func.func @transform_0(%arg0: i32) -> (i32, i32) {
    %c0_i32 = arith.constant 0 : i32
    %c0_i32_0 = arith.constant 0 : i32
    return %c0_i32, %arg0 : i32, i32
  }
  func.func @transform_1(%arg0: i32) -> (i32, i32) {
    %c0_i32 = arith.constant 0 : i32
    %c0_i32_0 = arith.constant 0 : i32
    return %c0_i32, %arg0 : i32, i32
  }
}

</mosaic_0001>

<llo_original>
// kernel: tpu_custom_call.1
$region0: #{tpu_custom_call.1}
  #allocation0 [shape = 'u32[]', space=smem, size = 0x4, offset = 0x4, fixed_abs, tag = 'smem constant byte address 0x4 - core index']
  #allocation1 [shape = 'u32[144,128]{1,0:T(1,128)}', space=vmem, size = 0x12000, scoped, tag = 'internal scratch']
  %s0 = inlined_call_operand.hbm [shape: f32[16,256], index: 0, kind: input, shape index: {}]
  %s1 = inlined_call_operand.hbm [shape: f32[15,256], index: 1, kind: output, shape index: {}]
  %s2 = sld [smem:[#allocation0]]
  $region41: #{tpu_custom_call.1} parent=0
    _
  %s4 = ssub.s32 1, %s2
  %s5 = scalar_select 0, %s4, %s2
  $region1: #{tpu_custom_call.1} parent=0
    #allocation2 [shape = 'u8[16384]{0}', space=vmem, size = 0x4000, scoped, tag = 'input window, operand 0']
    #allocation3 [shape = 's32[2]{0}', space=sflag, size = 0x8, scoped, tag = 'scoped memory for tpu_custom_call.1']
    #allocation4 [shape = 's32[2]{0}', space=sflag, size = 0x8, scoped, tag = 'scoped memory for tpu_custom_call.1']
    #allocation5 [shape = 'u8[16384]{0}', space=vmem, size = 0x4000, scoped, tag = 'output window, operand 0']
    %6 = vsyncpa [#allocation3], 0
    %s7 = scalar_lea.sflag [#allocation3], 1
    %8 = vsyncpa %s7, 0
    %9 = vsyncpa [#allocation4], 0
    %s10 = scalar_lea.sflag [#allocation4], 1
    %11 = vsyncpa %s10, 0
    loop: start=0, step=1, limit=4
    $region2: #{tpu_custom_call.1} parent=1 // loop_pre_header
      _
    $region3: #{tpu_custom_call.1} parent=1 // loop_header
      %s13 = sphi 0, %s17
      %p14 = scmp.ge.s32.totalorder %s13, 4
      %s23 = sphi 0, %s25
      %s26 = sphi 0, %s23
      %s27 = sphi 0, %s26
      %s43 = sphi 0, %s27
      %s49 = sphi 0, %s51
      %s52 = sphi 0, %s49
      %s53 = sphi 0, %s52
      %s69 = sphi 0, %s53
    $region4: #{tpu_custom_call.1} parent=1 // loop_header_branch
      %16 = sbr.rel (%p14) target = $region8
    $region5: #{tpu_custom_call.1} parent=1 // loop_body
      %s18 = ssub.s32 %s13, 1
      %s19 = ssub.s32 %s13, 2
      %s20 = sadd.s32 %s13, 1
      %s21 = ssub.s32 %s13, %s20
      %p22 = scmp.eq.s32.totalorder %s21, 0
      %s24 = sadd.s32 %s23, 1
      %s25 = scalar_select %p22, %s23, %s24
      %p28 = pneg %p22
      %p29 = scmp.eq.s32.totalorder %s13, 1
      %p30 = por %p28, %p29
      %p31 = scmp.ne.s32.totalorder %s23, %s26
      %p32 = scmp.eq.s32.totalorder %s13, 0
      %p33 = por %p31, %p32
      %p34 = scmp.ne.s32.totalorder %s23, %s26
      %p35 = scmp.eq.s32.totalorder %s18, 1
      %p36 = por %p34, %p35
      %p37 = scmp.ne.s32.totalorder %s26, %s27
      %p38 = scmp.eq.s32.totalorder %s18, 0
      %p39 = por %p37, %p38
      %p40 = scmp.ne.s32.totalorder %s26, %s27
      %p41 = scmp.eq.s32.totalorder %s19, 1
      %p42 = por %p40, %p41
      %p44 = scmp.ne.s32.totalorder %s27, %s43
      %p45 = scmp.eq.s32.totalorder %s19, 0
      %p46 = por %p44, %p45
      %s47 = ssub.s32 %s13, %s20
      %p48 = scmp.eq.s32.totalorder %s47, 0
      %s50 = sadd.s32 %s49, 1
      %s51 = scalar_select %p48, %s49, %s50
      %p54 = pneg %p48
      %p55 = scmp.eq.s32.totalorder %s13, 1
      %p56 = por %p54, %p55
      %p57 = scmp.ne.s32.totalorder %s49, %s52
      %p58 = scmp.eq.s32.totalorder %s13, 0
      %p59 = por %p57, %p58
      %p60 = scmp.ne.s32.totalorder %s49, %s52
      %p61 = scmp.eq.s32.totalorder %s18, 1
      %p62 = por %p60, %p61
      %p63 = scmp.ne.s32.totalorder %s52, %s53
      %p64 = scmp.eq.s32.totalorder %s18, 0
      %p65 = por %p63, %p64
      %p66 = scmp.ne.s32.totalorder %s52, %s53
      %p67 = scmp.eq.s32.totalorder %s19, 1
      %p68 = por %p66, %p67
      %p70 = scmp.ne.s32.totalorder %s53, %s69
      %p71 = scmp.eq.s32.totalorder %s19, 0
      %p72 = por %p70, %p71
      %p73 = scmp.le.s32.totalorder 1, %s13
      %p74 = scmp.lt.s32.totalorder %s13, 3
      %p75 = pnand %p73, %p74
      %p76 = pneg %p75
      // Predicated region
      $region9: #{tpu_custom_call.1} parent=5 // pred_check
        _
      $region10: #{tpu_custom_call.1} parent=5 // pred_check_branch
        %78 = sbr.rel (%p75) target = $region12
      $region11: #{tpu_custom_call.1} parent=5 // pred_region
        %s79 = ssub.s32 %s13, 1
      $region12: #{tpu_custom_call.1} parent=5 // pred_fallthru
        _
      %p80 = scmp.lt.s32.totalorder %s13, 2
      // Predicated region
      $region13: #{tpu_custom_call.1} parent=5 // pred_check
        %p81 = pneg %p80
      $region14: #{tpu_custom_call.1} parent=5 // pred_check_branch
        %83 = sbr.rel (%p81) target = $region16
      $region15: #{tpu_custom_call.1} parent=5 // pred_region
        // Predicated region
        $region17: #{tpu_custom_call.1} parent=15 // pred_check
          %p84 = pneg %p33
        $region18: #{tpu_custom_call.1} parent=15 // pred_check_branch
          %86 = sbr.rel (%p84) target = $region20
        $region19: #{tpu_custom_call.1} parent=15 // pred_region
          %s87 = sand.u32 %s23, 1
          %s88 = scalar_lea.sflag [#allocation3], %s87
          %s89 = sand.u32 %s23, 1
          %s90 = smul.addr %s89, 16
          %s91 = scalar_lea.vmem [#allocation2], %s90
          %s93 = ssub.s32 256, 256
          %94 = vsyncadd %s88, %s93
          %s95 = smul.addr %s13, 128
          %s96 = scalar_lea.hbm %s0, %s95
          %s97 = sshll.u32 %s91, 4
          %s98 = int_to_ptr.vmem [resolvable:$true] %s97
          %103 = dma.hbm_to_vmem [thread:$0]  %s96, 256, %s98, %s88, 256, 128, 8
        $region20: #{tpu_custom_call.1} parent=15 // pred_fallthru
          _
      $region16: #{tpu_custom_call.1} parent=5 // pred_fallthru
        _
      %p104 = scmp.le.s32.totalorder 1, %s13
      %p105 = scmp.lt.s32.totalorder %s13, 3
      %p106 = pnand %p104, %p105
      %p107 = pneg %p106
      // Predicated region
      $region21: #{tpu_custom_call.1} parent=5 // pred_check
        _
      $region22: #{tpu_custom_call.1} parent=5 // pred_check_branch
        %109 = sbr.rel (%p106) target = $region24
      $region23: #{tpu_custom_call.1} parent=5 // pred_region
        %s110 = ssub.s32 %s13, 1
        %s111 = sand.u32 %s26, 1
        %s112 = scalar_lea.sflag [#allocation3], %s111
        %s113 = sand.u32 %s26, 1
        %s114 = smul.addr %s113, 16
        %s115 = scalar_lea.vmem [#allocation2], %s114
        // Predicated region
        $region25: #{tpu_custom_call.1} parent=23 // pred_check
          %p116 = pneg %p39
        $region26: #{tpu_custom_call.1} parent=23 // pred_check_branch
          %118 = sbr.rel (%p116) target = $region28
        $region27: #{tpu_custom_call.1} parent=23 // pred_region
          %119 = dma.done %s112, 256
        $region28: #{tpu_custom_call.1} parent=23 // pred_fallthru
          _
        %s120 = sand.u32 %s26, 1
        %s121 = scalar_lea.sflag [#allocation3], %s120
        %s122 = sand.u32 %s26, 1
        %s123 = smul.addr %s122, 16
        %s124 = scalar_lea.vmem [#allocation2], %s123
        %p125 = pneg %p39
        %p126 = pneg %p36
        %p127 = pneg %p65
        %p128 = pneg %p62
        %s129 = sand.u32 %s52, 1
        %s130 = scalar_lea.sflag [#allocation4], %s129
        %s131 = sand.u32 %s52, 1
        %s132 = smul.addr %s131, 16
        %s133 = scalar_lea.vmem [#allocation5], %s132
        %v134 = vld [vmem:[%s115] sm:$0xff]
        %v135 = vld [vmem:[%s115 + $0x8] sm:$0xff]
        %vm138 = vcmask 1040384
        %v139 = vrot.slane %v134, 7
        %v140 = vrot.slane %v135, 7
        %v141 = vsel %vm138, %v139, %v140
        %v144 = vsub.f32 %v134, %v139
        %v145 = vsub.f32 %v135, %v141
        %v146 = vmul.f32 %v144, 0.70710677
        %v147 = vmul.f32 %v145, 0.70710677
        %v148 = vmul.f32 %v146, %v146
        %v149 = vmul.f32 %v147, %v147
        %150 = vst [vmem:[%s133 - $0x1] sm:$0xfe] %v148
        %151 = vst [vmem:[%s133 + $0x7] sm:$0xff] %v149
        %s152 = sand.u32 %s52, 1
        %s153 = scalar_lea.sflag [#allocation4], %s152
        %s154 = sand.u32 %s52, 1
        %s155 = smul.addr %s154, 16
        %s156 = scalar_lea.vmem [#allocation5], %s155
        // Predicated region
        $region29: #{tpu_custom_call.1} parent=23 // pred_check
          %p157 = pneg %p62
        $region30: #{tpu_custom_call.1} parent=23 // pred_check_branch
          %159 = sbr.rel (%p157) target = $region32
        $region31: #{tpu_custom_call.1} parent=23 // pred_region
          %s161 = ssub.s32 256, 256
          %162 = vsyncadd %s153, %s161
          %s163 = smul.addr %s18, 128
          %s164 = scalar_lea.hbm %s1, %s163
          %s165 = sshll.u32 %s156, 4
          %s166 = int_to_ptr.vmem [resolvable:$true] %s165
          %171 = dma.vmem_to_hbm [thread:$0]  %s166, 256, %s164, %s153, 128, 256, 8
        $region32: #{tpu_custom_call.1} parent=23 // pred_fallthru
          _
      $region24: #{tpu_custom_call.1} parent=5 // pred_fallthru
        _
      %p172 = scmp.le.s32.totalorder 2, %s13
      // Predicated region
      $region33: #{tpu_custom_call.1} parent=5 // pred_check
        %p173 = pneg %p172
      $region34: #{tpu_custom_call.1} parent=5 // pred_check_branch
        %175 = sbr.rel (%p173) target = $region36
      $region35: #{tpu_custom_call.1} parent=5 // pred_region
        %s176 = ssub.s32 %s13, 2
        // Predicated region
        $region37: #{tpu_custom_call.1} parent=35 // pred_check
          %p177 = pneg %p68
        $region38: #{tpu_custom_call.1} parent=35 // pred_check_branch
          %179 = sbr.rel (%p177) target = $region40
        $region39: #{tpu_custom_call.1} parent=35 // pred_region
          %s180 = sand.u32 %s53, 1
          %s181 = scalar_lea.sflag [#allocation4], %s180
          %s182 = sand.u32 %s53, 1
          %s183 = smul.addr %s182, 16
          %s184 = scalar_lea.vmem [#allocation5], %s183
          %185 = dma.done %s181, 256
        $region40: #{tpu_custom_call.1} parent=35 // pred_fallthru
          _
      $region36: #{tpu_custom_call.1} parent=5 // pred_fallthru
        _
    $region6: #{tpu_custom_call.1} parent=1 // loop_footer
      %s17 = sadd.s32 1, %s13
    $region7: #{tpu_custom_call.1} parent=1 // loop_footer_branch
      %12 = sbr.rel target = $region3
    $region8: #{tpu_custom_call.1} parent=1 // loop_exit
      _
    %186 = vsyncpa [#allocation3], 1
    %s187 = scalar_lea.sflag [#allocation3], 1
    %188 = vsyncpa %s187, 1
    %189 = vsyncpa [#allocation4], 1
    %s190 = scalar_lea.sflag [#allocation4], 1
    %191 = vsyncpa %s190, 1

</llo_original>
